<compile_context>
chip_gen: v7x
topology: tpu7x:2x2x1
jax: 0.10.0
libtpu: 0.0.40
codegen_flags: <defaults>
</compile_context>

<pallas_src>
import jax
import jax.numpy as jnp
from jax.experimental import pallas as pl
from jax.experimental.pallas import tpu as pltpu

_INV_SQRT2 = 0.7071067811865476   # 1/sqrt(2), Python float -> trace literal
_LN_EPS = 1e-5                    # LayerNorm eps, Python float -> trace literal


def _make_kernel(unroll):
    def kernel(x_ref, w_ref, b_ref, o_ref):
        step = pl.program_id(0)

        # Seed the resident hidden state (the output block) on the first grid step.
        @pl.when(step == 0)
        def _():
            o_ref[...] = x_ref[...].astype(jnp.float32)

        h = o_ref[...]                                  # (B, dim) f32, resident

        for u in range(unroll):                         # fully unrolled, static slices
            w = w_ref[u]                                # (dim, dim), already [K, N] (pre-transposed)
            b = b_ref[u]                                # (1, dim) f32
            # Linear: matmul in the streamed weight dtype (bf16 native MXU), f32 accumulation.
            y = jnp.dot(h.astype(w.dtype), w, preferred_element_type=jnp.float32) + b
            # LayerNorm over last dim, no affine, eps=1e-5, biased variance.
            # Two independent XLU reductions (E[y], E[y^2]) instead of a dependent (y-mean)^2 pass.
            mean = jnp.mean(y, axis=-1, keepdims=True)
            msq = jnp.mean(y * y, axis=-1, keepdims=True)
            var = jnp.maximum(msq - mean * mean, 0.0)
            yn = (y - mean) * jax.lax.rsqrt(var + _LN_EPS)
            # Exact GELU: 0.5 * x * (1 + erf(x / sqrt(2)))  (PyTorch nn.GELU default).
            h = 0.5 * yn * (1.0 + jax.lax.erf(yn * _INV_SQRT2))

        o_ref[...] = h

    return kernel


def seqnn_lineargelu(x, W_all, b_all, *, weight_dtype=jnp.bfloat16, max_unroll=8,
                     weight_block_budget_bytes=48 * 1024 * 1024):
    """x: (B, dim) f32; W_all: (S, dim, dim); b_all: (S, dim). Returns (B, dim) f32."""
    num_steps, dim, dim2 = W_all.shape
    assert dim == dim2 and x.shape[-1] == dim and b_all.shape == (num_steps, dim)
    B = x.shape[0]

    # Pre-transpose once in the wrapper so the kernel feeds the MXU its native
    # lhs[M,K] x rhs[K,N] shape (no per-step in-kernel transpose), and stream the
    # weights in a narrow dtype (bf16 by default) to halve HBM traffic.
    W_t = jnp.swapaxes(W_all, 1, 2).astype(weight_dtype)
    b3 = b_all.reshape(num_steps, 1, dim).astype(jnp.float32)

    wbytes = jnp.dtype(weight_dtype).itemsize

    # Largest unroll factor that divides num_steps, is <= max_unroll, and whose
    # double-buffered weight block fits the (v7x-safe) VMEM budget.
    unroll = 1
    for cand in range(min(max_unroll, num_steps), 0, -1):
        if num_steps % cand == 0 and 2 * cand * dim * dim * wbytes <= weight_block_budget_bytes:
            unroll = cand
            break
    # TODO(synk): if a single dim x dim weight block exceeds the VMEM budget (very large
    # dim), add an inner output-N tiling grid axis with an f32 accumulator and apply
    # LayerNorm+GELU only on the last N tile.

    grid = (num_steps // unroll,)

    # Explicit scoped-VMEM sizing: double-buffered weight + bias blocks
    # + a few (B, dim) f32 activation buffers + margin.
    h_bytes = B * dim * 4
    vmem_needed = (2 * unroll * dim * dim * wbytes) + (2 * unroll * dim * 4) \
        + 4 * h_bytes + (1 << 20)
    vmem_limit = int(min(max(vmem_needed, 32 << 20), 64 << 20))  # keep <= v7x physical VMEM

    return pl.pallas_call(
        _make_kernel(unroll),
        out_shape=jax.ShapeDtypeStruct((B, dim), jnp.float32),
        grid_spec=pltpu.PrefetchScalarGridSpec(
            num_scalar_prefetch=0,
            grid=grid,
            in_specs=[
                # hidden-state seed: constant block index -> fetched once, stays resident
                pl.BlockSpec((B, dim), lambda s: (0, 0)),
                # U pre-transposed weights per grid step, pipelined (double-buffered)
                pl.BlockSpec((unroll, dim, dim), lambda s: (s, 0, 0)),
                # U biases per grid step, pipelined (tiny)
                pl.BlockSpec((unroll, 1, dim), lambda s: (s, 0, 0)),
            ],
            # Output block index is constant: the output IS the resident f32 hidden state,
            # read-modified-written every grid step, written back to HBM at grid end.
            out_specs=pl.BlockSpec((B, dim), lambda s: (0, 0)),
        ),
        compiler_params=pltpu.CompilerParams(
            dimension_semantics=("arbitrary",),   # sequential dependence across steps
            vmem_limit_bytes=vmem_limit,
        ),
    )(x, W_t, b3)


def _reference(x, W_all, b_all):
    """Pure-JAX reference matching the PyTorch module (f32)."""
    h = x.astype(jnp.float32)
    for s in range(W_all.shape[0]):
        y = h @ W_all[s].T + b_all[s]
        mean = jnp.mean(y, axis=-1, keepdims=True)
        var = jnp.mean((y - mean) ** 2, axis=-1, keepdims=True)
        yn = (y - mean) / jnp.sqrt(var + 1e-5)
        h = 0.5 * yn * (1.0 + jax.lax.erf(yn / jnp.sqrt(2.0)))
    return h


if __name__ == "__main__":
    key = jax.random.PRNGKey(0)
    # Small but lane-dense test shapes: B multiple of 8 (sublanes), dim multiple of 128 (lanes).
    B, dim, num_steps = 8, 128, 4

    kx, kw, kb = jax.random.split(key, 3)
    x = jax.random.normal(kx, (B, dim), dtype=jnp.float32)
    # Deterministic synthetic parameters (PyTorch Linear-like scale: U(-1/sqrt(dim), 1/sqrt(dim))).
    bound = 1.0 / (dim ** 0.5)
    W_all = jax.random.uniform(kw, (num_steps, dim, dim), jnp.float32, -bound, bound)
    b_all = jax.random.uniform(kb, (num_steps, dim), jnp.float32, -bound, bound)

    ref = _reference(x, W_all, b_all)

    # Full-precision weight path: tight agreement with the PyTorch semantics.
    out_f32 = jax.block_until_ready(seqnn_lineargelu(x, W_all, b_all, weight_dtype=jnp.float32))
    assert out_f32.shape == (B, dim)
    err_f32 = float(jnp.max(jnp.abs(out_f32 - ref)))
    assert err_f32 < 1e-3, err_f32

    # Default fast path: bf16 weight streaming, f32 accumulation (looser tolerance).
    out_bf16 = jax.block_until_ready(seqnn_lineargelu(x, W_all, b_all))
    assert out_bf16.shape == (B, dim)
    err_bf16 = float(jnp.max(jnp.abs(out_bf16 - ref)))
    assert err_bf16 < 5e-2, err_bf16

    print("KERNEL_OK")
</pallas_src>

<mosaic_0001>
module attributes {stable_mosaic.version = 11 : i64} {
  func.func @kernel(%arg0: i32, %arg1: memref<8x128xf32, #tpu.memory_space<vmem>>, %arg2: memref<4x128x128xf32, #tpu.memory_space<vmem>>, %arg3: memref<4x1x128xf32, #tpu.memory_space<vmem>>, %arg4: memref<8x128xf32, #tpu.memory_space<vmem>>) attributes {dimension_semantics = [#tpu.dimension_semantics<arbitrary>], iteration_bounds = array<i64: 1>, scalar_prefetch = 0 : i64, scratch_operands = 0 : i64, tpu.core_type = #tpu.core_type<tc>, window_params = [{pipeline_mode = #tpu.pipeline_mode<synchronous>, transform_indices = @transform_0, window_bounds = array<i64: 8, 128>}, {transform_indices = @transform_1, window_bounds = array<i64: 4, 128, 128>}, {transform_indices = @transform_2, window_bounds = array<i64: 4, 1, 128>}, {pipeline_mode = #tpu.pipeline_mode<synchronous>, transform_indices = @transform_3, window_bounds = array<i64: 8, 128>}]} {
    %c0_i32 = arith.constant 0 : i32
    %0 = arith.cmpi eq, %arg0, %c0_i32 : i32
    %1 = arith.extui %0 : i1 to i32
    %c0_i32_0 = arith.constant 0 : i32
    %2 = arith.cmpi ne, %1, %c0_i32_0 : i32
    scf.if %2 {
      %c0_64 = arith.constant 0 : index
      %c0_65 = arith.constant 0 : index
      %145 = vector.load %arg1[%c0_64, %c0_65] : memref<8x128xf32, #tpu.memory_space<vmem>>, vector<8x128xf32>
      %c0_66 = arith.constant 0 : index
      %c0_67 = arith.constant 0 : index
      %146 = vector.load %arg4[%c0_66, %c0_67] : memref<8x128xf32, #tpu.memory_space<vmem>>, vector<8x128xf32>
      tpu.vector_store %arg4[%c0_66, %c0_67], %145 {strides = array<i32>} : memref<8x128xf32, #tpu.memory_space<vmem>>, vector<8x128xf32>,
    } else {
    }
    %c0 = arith.constant 0 : index
    %c0_1 = arith.constant 0 : index
    %3 = vector.load %arg4[%c0, %c0_1] : memref<8x128xf32, #tpu.memory_space<vmem>>, vector<8x128xf32>
    %c0_2 = arith.constant 0 : index
    %c0_3 = arith.constant 0 : index
    %c0_4 = arith.constant 0 : index
    %4 = vector.load %arg2[%c0_2, %c0_3, %c0_4] : memref<4x128x128xf32, #tpu.memory_space<vmem>>, vector<1x128x128xf32>
    %5 = vector.shape_cast %4 : vector<1x128x128xf32> to vector<128x128xf32>
    %c0_5 = arith.constant 0 : index
    %c0_6 = arith.constant 0 : index
    %c0_7 = arith.constant 0 : index
    %6 = vector.load %arg3[%c0_5, %c0_6, %c0_7] : memref<4x1x128xf32, #tpu.memory_space<vmem>>, vector<1x1x128xf32>
    %7 = vector.shape_cast %6 : vector<1x1x128xf32> to vector<1x128xf32>
    %cst = arith.constant dense<0.000000e+00> : vector<8x128xf32>
    %8 = tpu.matmul %3, %5, %cst {dimension_numbers = #tpu.dot_dimension_numbers<[1], [0], [0], [1], [0, 0, 1, 1], [], []>} : vector<8x128xf32>, vector<128x128xf32>, vector<8x128xf32> -> vector<8x128xf32>
    %9 = vector.broadcast %7 : vector<1x128xf32> to vector<8x128xf32>
    %10 = arith.addf %8, %9 : vector<8x128xf32>
    %cst_8 = arith.constant dense<0.000000e+00> : vector<8xf32>
    %11 = vector.multi_reduction <add>, %10, %cst_8 [1] : vector<8x128xf32> to vector<8xf32>
    %12 = vector.shape_cast %11 : vector<8xf32> to vector<8x1xf32>
    %cst_9 = arith.constant 1.280000e+02 : f32
    %13 = vector.broadcast %cst_9 : f32 to vector<8x1xf32>
    %14 = arith.divf %12, %13 : vector<8x1xf32>
    %15 = arith.mulf %10, %10 : vector<8x128xf32>
    %cst_10 = arith.constant dense<0.000000e+00> : vector<8xf32>
    %16 = vector.multi_reduction <add>, %15, %cst_10 [1] : vector<8x128xf32> to vector<8xf32>
    %17 = vector.shape_cast %16 : vector<8xf32> to vector<8x1xf32>
    %cst_11 = arith.constant 1.280000e+02 : f32
    %18 = vector.broadcast %cst_11 : f32 to vector<8x1xf32>
    %19 = arith.divf %17, %18 : vector<8x1xf32>
    %20 = arith.mulf %14, %14 : vector<8x1xf32>
    %21 = arith.subf %19, %20 : vector<8x1xf32>
    %cst_12 = arith.constant 0.000000e+00 : f32
    %22 = vector.broadcast %cst_12 : f32 to vector<8x1xf32>
    %23 = arith.maximumf %21, %22 : vector<8x1xf32>
    %24 = vector.broadcast %14 : vector<8x1xf32> to vector<8x128xf32>
    %25 = arith.subf %10, %24 : vector<8x128xf32>
    %cst_13 = arith.constant 9.99999974E-6 : f32
    %26 = vector.broadcast %cst_13 : f32 to vector<8x1xf32>
    %27 = arith.addf %23, %26 : vector<8x1xf32>
    %28 = math.rsqrt %27 : vector<8x1xf32>
    %29 = vector.broadcast %28 : vector<8x1xf32> to vector<8x128xf32>
    %30 = arith.mulf %25, %29 : vector<8x128xf32>
    %cst_14 = arith.constant 5.000000e-01 : f32
    %31 = vector.broadcast %cst_14 : f32 to vector<8x128xf32>
    %32 = arith.mulf %31, %30 : vector<8x128xf32>
    %cst_15 = arith.constant 0.707106769 : f32
    %33 = vector.broadcast %cst_15 : f32 to vector<8x128xf32>
    %34 = arith.mulf %30, %33 : vector<8x128xf32>
    %35 = math.erf %34 : vector<8x128xf32>
    %cst_16 = arith.constant 1.000000e+00 : f32
    %36 = vector.broadcast %cst_16 : f32 to vector<8x128xf32>
    %37 = arith.addf %36, %35 : vector<8x128xf32>
    %38 = arith.mulf %32, %37 : vector<8x128xf32>
    %c1 = arith.constant 1 : index
    %c0_17 = arith.constant 0 : index
    %c0_18 = arith.constant 0 : index
    %39 = vector.load %arg2[%c1, %c0_17, %c0_18] : memref<4x128x128xf32, #tpu.memory_space<vmem>>, vector<1x128x128xf32>
    %40 = vector.shape_cast %39 : vector<1x128x128xf32> to vector<128x128xf32>
    %c1_19 = arith.constant 1 : index
    %c0_20 = arith.constant 0 : index
    %c0_21 = arith.constant 0 : index
    %41 = vector.load %arg3[%c1_19, %c0_20, %c0_21] : memref<4x1x128xf32, #tpu.memory_space<vmem>>, vector<1x1x128xf32>
    %42 = vector.shape_cast %41 : vector<1x1x128xf32> to vector<1x128xf32>
    %cst_22 = arith.constant dense<0.000000e+00> : vector<8x128xf32>
    %43 = tpu.matmul %38, %40, %cst_22 {dimension_numbers = #tpu.dot_dimension_numbers<[1], [0], [0], [1], [0, 0, 1, 1], [], []>} : vector<8x128xf32>, vector<128x128xf32>, vector<8x128xf32> -> vector<8x128xf32>
    %44 = vector.broadcast %42 : vector<1x128xf32> to vector<8x128xf32>
    %45 = arith.addf %43, %44 : vector<8x128xf32>
    %cst_23 = arith.constant dense<0.000000e+00> : vector<8xf32>
    %46 = vector.multi_reduction <add>, %45, %cst_23 [1] : vector<8x128xf32> to vector<8xf32>
    %47 = vector.shape_cast %46 : vector<8xf32> to vector<8x1xf32>
    %cst_24 = arith.constant 1.280000e+02 : f32
    %48 = vector.broadcast %cst_24 : f32 to vector<8x1xf32>
    %49 = arith.divf %47, %48 : vector<8x1xf32>
    %50 = arith.mulf %45, %45 : vector<8x128xf32>
    %cst_25 = arith.constant dense<0.000000e+00> : vector<8xf32>
    %51 = vector.multi_reduction <add>, %50, %cst_25 [1] : vector<8x128xf32> to vector<8xf32>
    %52 = vector.shape_cast %51 : vector<8xf32> to vector<8x1xf32>
    %cst_26 = arith.constant 1.280000e+02 : f32
    %53 = vector.broadcast %cst_26 : f32 to vector<8x1xf32>
    %54 = arith.divf %52, %53 : vector<8x1xf32>
    %55 = arith.mulf %49, %49 : vector<8x1xf32>
    %56 = arith.subf %54, %55 : vector<8x1xf32>
    %cst_27 = arith.constant 0.000000e+00 : f32
    %57 = vector.broadcast %cst_27 : f32 to vector<8x1xf32>
    %58 = arith.maximumf %56, %57 : vector<8x1xf32>
    %59 = vector.broadcast %49 : vector<8x1xf32> to vector<8x128xf32>
    %60 = arith.subf %45, %59 : vector<8x128xf32>
    %cst_28 = arith.constant 9.99999974E-6 : f32
    %61 = vector.broadcast %cst_28 : f32 to vector<8x1xf32>
    %62 = arith.addf %58, %61 : vector<8x1xf32>
    %63 = math.rsqrt %62 : vector<8x1xf32>
    %64 = vector.broadcast %63 : vector<8x1xf32> to vector<8x128xf32>
    %65 = arith.mulf %60, %64 : vector<8x128xf32>
    %cst_29 = arith.constant 5.000000e-01 : f32
    %66 = vector.broadcast %cst_29 : f32 to vector<8x128xf32>
    %67 = arith.mulf %66, %65 : vector<8x128xf32>
    %cst_30 = arith.constant 0.707106769 : f32
    %68 = vector.broadcast %cst_30 : f32 to vector<8x128xf32>
    %69 = arith.mulf %65, %68 : vector<8x128xf32>
    %70 = math.erf %69 : vector<8x128xf32>
    %cst_31 = arith.constant 1.000000e+00 : f32
    %71 = vector.broadcast %cst_31 : f32 to vector<8x128xf32>
    %72 = arith.addf %71, %70 : vector<8x128xf32>
    %73 = arith.mulf %67, %72 : vector<8x128xf32>
    %c2 = arith.constant 2 : index
    %c0_32 = arith.constant 0 : index
    %c0_33 = arith.constant 0 : index
    %74 = vector.load %arg2[%c2, %c0_32, %c0_33] : memref<4x128x128xf32, #tpu.memory_space<vmem>>, vector<1x128x128xf32>
    %75 = vector.shape_cast %74 : vector<1x128x128xf32> to vector<128x128xf32>
    %c2_34 = arith.constant 2 : index
    %c0_35 = arith.constant 0 : index
    %c0_36 = arith.constant 0 : index
    %76 = vector.load %arg3[%c2_34, %c0_35, %c0_36] : memref<4x1x128xf32, #tpu.memory_space<vmem>>, vector<1x1x128xf32>
    %77 = vector.shape_cast %76 : vector<1x1x128xf32> to vector<1x128xf32>
    %cst_37 = arith.constant dense<0.000000e+00> : vector<8x128xf32>
    %78 = tpu.matmul %73, %75, %cst_37 {dimension_numbers = #tpu.dot_dimension_numbers<[1], [0], [0], [1], [0, 0, 1, 1], [], []>} : vector<8x128xf32>, vector<128x128xf32>, vector<8x128xf32> -> vector<8x128xf32>
    %79 = vector.broadcast %77 : vector<1x128xf32> to vector<8x128xf32>
    %80 = arith.addf %78, %79 : vector<8x128xf32>
    %cst_38 = arith.constant dense<0.000000e+00> : vector<8xf32>
    %81 = vector.multi_reduction <add>, %80, %cst_38 [1] : vector<8x128xf32> to vector<8xf32>
    %82 = vector.shape_cast %81 : vector<8xf32> to vector<8x1xf32>
    %cst_39 = arith.constant 1.280000e+02 : f32
    %83 = vector.broadcast %cst_39 : f32 to vector<8x1xf32>
    %84 = arith.divf %82, %83 : vector<8x1xf32>
    %85 = arith.mulf %80, %80 : vector<8x128xf32>
    %cst_40 = arith.constant dense<0.000000e+00> : vector<8xf32>
    %86 = vector.multi_reduction <add>, %85, %cst_40 [1] : vector<8x128xf32> to vector<8xf32>
    %87 = vector.shape_cast %86 : vector<8xf32> to vector<8x1xf32>
    %cst_41 = arith.constant 1.280000e+02 : f32
    %88 = vector.broadcast %cst_41 : f32 to vector<8x1xf32>
    %89 = arith.divf %87, %88 : vector<8x1xf32>
    %90 = arith.mulf %84, %84 : vector<8x1xf32>
    %91 = arith.subf %89, %90 : vector<8x1xf32>
    %cst_42 = arith.constant 0.000000e+00 : f32
    %92 = vector.broadcast %cst_42 : f32 to vector<8x1xf32>
    %93 = arith.maximumf %91, %92 : vector<8x1xf32>
    %94 = vector.broadcast %84 : vector<8x1xf32> to vector<8x128xf32>
    %95 = arith.subf %80, %94 : vector<8x128xf32>
    %cst_43 = arith.constant 9.99999974E-6 : f32
    %96 = vector.broadcast %cst_43 : f32 to vector<8x1xf32>
    %97 = arith.addf %93, %96 : vector<8x1xf32>
    %98 = math.rsqrt %97 : vector<8x1xf32>
    %99 = vector.broadcast %98 : vector<8x1xf32> to vector<8x128xf32>
    %100 = arith.mulf %95, %99 : vector<8x128xf32>
    %cst_44 = arith.constant 5.000000e-01 : f32
    %101 = vector.broadcast %cst_44 : f32 to vector<8x128xf32>
    %102 = arith.mulf %101, %100 : vector<8x128xf32>
    %cst_45 = arith.constant 0.707106769 : f32
    %103 = vector.broadcast %cst_45 : f32 to vector<8x128xf32>
    %104 = arith.mulf %100, %103 : vector<8x128xf32>
    %105 = math.erf %104 : vector<8x128xf32>
    %cst_46 = arith.constant 1.000000e+00 : f32
    %106 = vector.broadcast %cst_46 : f32 to vector<8x128xf32>
    %107 = arith.addf %106, %105 : vector<8x128xf32>
    %108 = arith.mulf %102, %107 : vector<8x128xf32>
    %c3 = arith.constant 3 : index
    %c0_47 = arith.constant 0 : index
    %c0_48 = arith.constant 0 : index
    %109 = vector.load %arg2[%c3, %c0_47, %c0_48] : memref<4x128x128xf32, #tpu.memory_space<vmem>>, vector<1x128x128xf32>
    %110 = vector.shape_cast %109 : vector<1x128x128xf32> to vector<128x128xf32>
    %c3_49 = arith.constant 3 : index
    %c0_50 = arith.constant 0 : index
    %c0_51 = arith.constant 0 : index
    %111 = vector.load %arg3[%c3_49, %c0_50, %c0_51] : memref<4x1x128xf32, #tpu.memory_space<vmem>>, vector<1x1x128xf32>
    %112 = vector.shape_cast %111 : vector<1x1x128xf32> to vector<1x128xf32>
    %cst_52 = arith.constant dense<0.000000e+00> : vector<8x128xf32>
    %113 = tpu.matmul %108, %110, %cst_52 {dimension_numbers = #tpu.dot_dimension_numbers<[1], [0], [0], [1], [0, 0, 1, 1], [], []>} : vector<8x128xf32>, vector<128x128xf32>, vector<8x128xf32> -> vector<8x128xf32>
    %114 = vector.broadcast %112 : vector<1x128xf32> to vector<8x128xf32>
    %115 = arith.addf %113, %114 : vector<8x128xf32>
    %cst_53 = arith.constant dense<0.000000e+00> : vector<8xf32>
    %116 = vector.multi_reduction <add>, %115, %cst_53 [1] : vector<8x128xf32> to vector<8xf32>
    %117 = vector.shape_cast %116 : vector<8xf32> to vector<8x1xf32>
    %cst_54 = arith.constant 1.280000e+02 : f32
    %118 = vector.broadcast %cst_54 : f32 to vector<8x1xf32>
    %119 = arith.divf %117, %118 : vector<8x1xf32>
    %120 = arith.mulf %115, %115 : vector<8x128xf32>
    %cst_55 = arith.constant dense<0.000000e+00> : vector<8xf32>
    %121 = vector.multi_reduction <add>, %120, %cst_55 [1] : vector<8x128xf32> to vector<8xf32>
    %122 = vector.shape_cast %121 : vector<8xf32> to vector<8x1xf32>
    %cst_56 = arith.constant 1.280000e+02 : f32
    %123 = vector.broadcast %cst_56 : f32 to vector<8x1xf32>
    %124 = arith.divf %122, %123 : vector<8x1xf32>
    %125 = arith.mulf %119, %119 : vector<8x1xf32>
    %126 = arith.subf %124, %125 : vector<8x1xf32>
    %cst_57 = arith.constant 0.000000e+00 : f32
    %127 = vector.broadcast %cst_57 : f32 to vector<8x1xf32>
    %128 = arith.maximumf %126, %127 : vector<8x1xf32>
    %129 = vector.broadcast %119 : vector<8x1xf32> to vector<8x128xf32>
    %130 = arith.subf %115, %129 : vector<8x128xf32>
    %cst_58 = arith.constant 9.99999974E-6 : f32
    %131 = vector.broadcast %cst_58 : f32 to vector<8x1xf32>
    %132 = arith.addf %128, %131 : vector<8x1xf32>
    %133 = math.rsqrt %132 : vector<8x1xf32>
    %134 = vector.broadcast %133 : vector<8x1xf32> to vector<8x128xf32>
    %135 = arith.mulf %130, %134 : vector<8x128xf32>
    %cst_59 = arith.constant 5.000000e-01 : f32
    %136 = vector.broadcast %cst_59 : f32 to vector<8x128xf32>
    %137 = arith.mulf %136, %135 : vector<8x128xf32>
    %cst_60 = arith.constant 0.707106769 : f32
    %138 = vector.broadcast %cst_60 : f32 to vector<8x128xf32>
    %139 = arith.mulf %135, %138 : vector<8x128xf32>
    %140 = math.erf %139 : vector<8x128xf32>
    %cst_61 = arith.constant 1.000000e+00 : f32
    %141 = vector.broadcast %cst_61 : f32 to vector<8x128xf32>
    %142 = arith.addf %141, %140 : vector<8x128xf32>
    %143 = arith.mulf %137, %142 : vector<8x128xf32>
    %c0_62 = arith.constant 0 : index
    %c0_63 = arith.constant 0 : index
    %144 = vector.load %arg4[%c0_62, %c0_63] : memref<8x128xf32, #tpu.memory_space<vmem>>, vector<8x128xf32>
    tpu.vector_store %arg4[%c0_62, %c0_63], %143 {strides = array<i32>} : memref<8x128xf32, #tpu.memory_space<vmem>>, vector<8x128xf32>,
    return
  }
  func.func @transform_0(%arg0: i32) -> (i32, i32) {
    %c0_i32 = arith.constant 0 : i32
    %c0_i32_0 = arith.constant 0 : i32
    %c0_i32_1 = arith.constant 0 : i32
    return %c0_i32, %c0_i32_0 : i32, i32
  }
  func.func @transform_1(%arg0: i32) -> (i32, i32, i32) {
    %c0_i32 = arith.constant 0 : i32
    %c0_i32_0 = arith.constant 0 : i32
    %c0_i32_1 = arith.constant 0 : i32
    return %arg0, %c0_i32, %c0_i32_0 : i32, i32, i32
  }
  func.func @transform_2(%arg0: i32) -> (i32, i32, i32) {
    %c0_i32 = arith.constant 0 : i32
    %c0_i32_0 = arith.constant 0 : i32
    %c0_i32_1 = arith.constant 0 : i32
    return %arg0, %c0_i32, %c0_i32_0 : i32, i32, i32
  }
  func.func @transform_3(%arg0: i32) -> (i32, i32) {
    %c0_i32 = arith.constant 0 : i32
    %c0_i32_0 = arith.constant 0 : i32
    %c0_i32_1 = arith.constant 0 : i32
    return %c0_i32, %c0_i32_0 : i32, i32
  }
}

</mosaic_0001>

<llo_original>
// kernel: tpu_custom_call.1
$region0: #{tpu_custom_call.1}
  #allocation0 [shape = 'u32[]', space=smem, size = 0x4, offset = 0x4, fixed_abs, tag = 'smem constant byte address 0x4 - core index']
  #allocation1 [shape = 'u32[144,128]{1,0:T(1,128)}', space=vmem, size = 0x12000, scoped, tag = 'internal scratch']
  %s0 = inlined_call_operand.hbm [shape: f32[8,128], index: 0, kind: input, shape index: {}]
  %s1 = inlined_call_operand.hbm [shape: f32[4,128,128], index: 1, kind: input, shape index: {}]
  %s2 = inlined_call_operand.vmem [shape: f32[4,1,128], index: 2, kind: input, shape index: {}]
  %s3 = inlined_call_operand.hbm [shape: f32[8,128], index: 3, kind: output, shape index: {}]
  %s4 = sld [smem:[#allocation0]]
  $region34: #{tpu_custom_call.1} parent=0
    _
  %s6 = ssub.s32 1, %s4
  %s7 = scalar_select 0, %s6, %s4
  $region1: #{tpu_custom_call.1} parent=0
    #allocation2 [shape = 'u8[4096]{0}', space=vmem, size = 0x1000, scoped, tag = 'input window, operand 0, single buffered']
    #allocation3 [shape = 's32[1]{0}', space=sflag, size = 0x4, scoped, tag = 'scoped memory for tpu_custom_call.1']
    #allocation4 [shape = 's32[1]{0}', space=sflag, size = 0x4, scoped, tag = 'scoped memory for tpu_custom_call.1']
    #allocation5 [shape = 'u8[262144]{0}', space=vmem, size = 0x40000, scoped, tag = 'input window, operand 1, single buffered']
    #allocation6 [shape = 's32[1]{0}', space=sflag, size = 0x4, scoped, tag = 'scoped memory for tpu_custom_call.1']
    #allocation7 [shape = 'u8[4096]{0}', space=vmem, size = 0x1000, scoped, tag = 'output window, operand 0, single buffered']
    %8 = vsyncpa [#allocation3], 0
    %9 = vsyncpa [#allocation6], 0
    %10 = vsyncpa [#allocation4], 0
    // Predicated region
    $region2: #{tpu_custom_call.1} parent=1 // pred_check
      _
    $region3: #{tpu_custom_call.1} parent=1 // pred_check_branch
      %12 = sbr.rel (0) target = $region5
    $region4: #{tpu_custom_call.1} parent=1 // pred_region
      %s14 = ssub.s32 128, 128
      %15 = vsyncadd [#allocation3], %s14
      %s17 = sshll.u32 [#allocation2], 4
      %s18 = int_to_ptr.vmem [resolvable:$true] %s17
      %20 = dma.hbm_to_vmem [thread:$0]  %s0, 128, %s18, [#allocation3]
    $region5: #{tpu_custom_call.1} parent=1 // pred_fallthru
      _
    // Predicated region
    $region6: #{tpu_custom_call.1} parent=1 // pred_check
      _
    $region7: #{tpu_custom_call.1} parent=1 // pred_check_branch
      %22 = sbr.rel (0) target = $region9
    $region8: #{tpu_custom_call.1} parent=1 // pred_region
      %s24 = ssub.s32 8192, 8192
      %25 = vsyncadd [#allocation6], %s24
      %s26 = sshll.u32 [#allocation5], 4
      %s27 = int_to_ptr.vmem [resolvable:$true] %s26
      %32 = dma.hbm_to_vmem [thread:$0]  %s1, 8192, %s27, [#allocation6], 128, 128, 8
    $region9: #{tpu_custom_call.1} parent=1 // pred_fallthru
      _
    // Predicated region
    $region10: #{tpu_custom_call.1} parent=1 // pred_check
      _
    $region11: #{tpu_custom_call.1} parent=1 // pred_check_branch
      %34 = sbr.rel (0) target = $region13
    $region12: #{tpu_custom_call.1} parent=1 // pred_region
      _
    $region13: #{tpu_custom_call.1} parent=1 // pred_fallthru
      _
    // Predicated region
    $region14: #{tpu_custom_call.1} parent=1 // pred_check
      _
    $region15: #{tpu_custom_call.1} parent=1 // pred_check_branch
      %36 = sbr.rel (0) target = $region17
    $region16: #{tpu_custom_call.1} parent=1 // pred_region
      %37 = dma.done [#allocation3], 128
    $region17: #{tpu_custom_call.1} parent=1 // pred_fallthru
      _
    // Predicated region
    $region18: #{tpu_custom_call.1} parent=1 // pred_check
      _
    $region19: #{tpu_custom_call.1} parent=1 // pred_check_branch
      %39 = sbr.rel (0) target = $region21
    $region20: #{tpu_custom_call.1} parent=1 // pred_region
      %40 = dma.done [#allocation6], 8192
    $region21: #{tpu_custom_call.1} parent=1 // pred_fallthru
      _
    %p41 = scmp.eq.s32.totalorder 0, 0
    // Predicated region
    $region22: #{tpu_custom_call.1} parent=1 // pred_check
      %p42 = pneg %p41
    $region23: #{tpu_custom_call.1} parent=1 // pred_check_branch
      %44 = sbr.rel (%p42) target = $region25
    $region24: #{tpu_custom_call.1} parent=1 // pred_region
      %v45 = vld [vmem:[#allocation2] sm:$0xff]
      %46 = vst [vmem:[#allocation7] sm:$0xff] %v45
    $region25: #{tpu_custom_call.1} parent=1 // pred_fallthru
      _
    %v47 = vld [vmem:[#allocation7] sm:$0xff]
    %v48 = vld [vmem:[#allocation5] sm:$0xff]
    %v49 = vld [vmem:[#allocation5 + $0x8] sm:$0xff]
    %v50 = vld [vmem:[#allocation5 + $0x10] sm:$0xff]
    %v51 = vld [vmem:[#allocation5 + $0x18] sm:$0xff]
    %v52 = vld [vmem:[#allocation5 + $0x20] sm:$0xff]
    %v53 = vld [vmem:[#allocation5 + $0x28] sm:$0xff]
    %v54 = vld [vmem:[#allocation5 + $0x30] sm:$0xff]
    %v55 = vld [vmem:[#allocation5 + $0x38] sm:$0xff]
    %v56 = vld [vmem:[#allocation5 + $0x40] sm:$0xff]
    %v57 = vld [vmem:[#allocation5 + $0x48] sm:$0xff]
    %v58 = vld [vmem:[#allocation5 + $0x50] sm:$0xff]
    %v59 = vld [vmem:[#allocation5 + $0x58] sm:$0xff]
    %v60 = vld [vmem:[#allocation5 + $0x60] sm:$0xff]
    %v61 = vld [vmem:[#allocation5 + $0x68] sm:$0xff]
    %v62 = vld [vmem:[#allocation5 + $0x70] sm:$0xff]
    %v63 = vld [vmem:[#allocation5 + $0x78] sm:$0xff]
    %v64 = vld [vmem:[%s2] sm:$0x1]
    %v66 = vlaneseq
    %v67 = vshrl.u32 %v66, 7
    %v68 = vsub.s32 0, %v67
    %v69 = vrot.slane %v64, %v68
    %71 = vmatprep.subr.mxu0 0.0
    %72 = vmatpush1.msra.mxu0 %v48
    %73 = vmatprep.subr.mxu0 0.0
    %74 = vmatpush1.msra.mxu0 %v49
    %75 = vmatprep.subr.mxu0 0.0
    %76 = vmatpush1.msra.mxu0 %v50
    %77 = vmatprep.subr.mxu0 0.0
    %78 = vmatpush1.msra.mxu0 %v51
    %79 = vmatprep.subr.mxu0 0.0
    %80 = vmatpush1.msra.mxu0 %v52
    %81 = vmatprep.subr.mxu0 0.0
    %82 = vmatpush1.msra.mxu0 %v53
    %83 = vmatprep.subr.mxu0 0.0
    %84 = vmatpush1.msra.mxu0 %v54
    %85 = vmatprep.subr.mxu0 0.0
    %86 = vmatpush1.msra.mxu0 %v55
    %87 = vmatprep.subr.mxu0 0.0
    %88 = vmatpush1.msra.mxu0 %v56
    %89 = vmatprep.subr.mxu0 0.0
    %90 = vmatpush1.msra.mxu0 %v57
    %91 = vmatprep.subr.mxu0 0.0
    %92 = vmatpush1.msra.mxu0 %v58
    %93 = vmatprep.subr.mxu0 0.0
    %94 = vmatpush1.msra.mxu0 %v59
    %95 = vmatprep.subr.mxu0 0.0
    %96 = vmatpush1.msra.mxu0 %v60
    %97 = vmatprep.subr.mxu0 0.0
    %98 = vmatpush1.msra.mxu0 %v61
    %99 = vmatprep.subr.mxu0 0.0
    %100 = vmatpush1.msra.mxu0 %v62
    %101 = vmatprep.subr.mxu0 0.0
    %102 = vmatpush1.msra.mxu0 %v63
    %103 = vmatprep.subr.mxu0 0.0
    %104 = vmatpush1.msra.mxu0 0.0
    %105 = vmatprep.subr.mxu0 0.0
    %106 = vmatpush1.msra.mxu0 0.0
    %107 = vmatprep.subr.mxu0 0.0
    %108 = vmatpush1.msra.mxu0 0.0
    %109 = vmatprep.subr.mxu0 0.0
    %110 = vmatpush1.msra.mxu0 0.0
    %111 = vmatprep.subr.mxu0 0.0
    %112 = vmatpush1.msra.mxu0 0.0
    %113 = vmatprep.subr.mxu0 0.0
    %114 = vmatpush1.msra.mxu0 0.0
    %115 = vmatprep.subr.mxu0 0.0
    %116 = vmatpush1.msra.mxu0 0.0
    %117 = vmatprep.subr.mxu0 0.0
    %118 = vmatpush1.msra.mxu0 0.0
    %119 = vmatprep.subr.mxu0 0.0
    %120 = vmatpush1.msra.mxu0 0.0
    %121 = vmatprep.subr.mxu0 0.0
    %122 = vmatpush1.msra.mxu0 0.0
    %123 = vmatprep.subr.mxu0 0.0
    %124 = vmatpush1.msra.mxu0 0.0
    %125 = vmatprep.subr.mxu0 0.0
    %126 = vmatpush1.msra.mxu0 0.0
    %127 = vmatprep.subr.mxu0 0.0
    %128 = vmatpush1.msra.mxu0 0.0
    %129 = vmatprep.subr.mxu0 0.0
    %130 = vmatpush1.msra.mxu0 0.0
    %131 = vmatprep.subr.mxu0 0.0
    %132 = vmatpush1.msra.mxu0 0.0
    %133 = vmatprep.subr.mxu0 0.0
    %134 = vmatpush1.msra.mxu0 0.0
    %135 = vmatprep.mubr.f32.mxu0 0.0
    %136 = vmatmul.mubr.f32.gmra.mrb[0].mxu0 %v47
    %v137 = vpop.f32.mrb[0].mxu0
    %v138 = vadd.f32 %v69, %v137
    %v139 = vpop.f32.mrb[0].mxu0
    %140 = vdwg.mxu0
    %141 = vadd.xlane.f32.xlu0 %v138
    %v142 = vpop.xlane.xlu0 %141
    %v143 = vrcp.pop 128.0
    %v144 = vmul.f32 %v142, %v143
    %v145 = vmul.f32 %v138, %v138
    %146 = vadd.xlane.f32.xlu0 %v145
    %v147 = vpop.xlane.xlu0 %146
    %v148 = vmul.f32 %v147, %v143
    %v149 = vmul.f32 %v144, %v144
    %v150 = vsub.f32 %v148, %v149
    %v151 = vmax.f32 %v150, 0.0
    %v152 = vsub.f32 %v138, %v144
    %v153 = vadd.f32 %v151, 1e-05
    %v154 = vrsqrt.pop %v153
    %v155 = vmul.f32 %v152, %v154
    %v156 = vmul.f32 %v155, 0.5
    %v157 = vmul.f32 %v155, 0.70710677
    %v158 = verf.f32.pop %v157
    %v159 = vadd.f32 %v158, 1.0
    %v160 = vmul.f32 %v156, %v159
    %s161 = scalar_lea.vmem [#allocation5], 128
    %v162 = vld [vmem:[%s161] sm:$0xff]
    %v163 = vld [vmem:[%s161 + $0x8] sm:$0xff]
    %v164 = vld [vmem:[%s161 + $0x10] sm:$0xff]
    %v165 = vld [vmem:[%s161 + $0x18] sm:$0xff]
    %v166 = vld [vmem:[%s161 + $0x20] sm:$0xff]
    %v167 = vld [vmem:[%s161 + $0x28] sm:$0xff]
    %v168 = vld [vmem:[%s161 + $0x30] sm:$0xff]
    %v169 = vld [vmem:[%s161 + $0x38] sm:$0xff]
    %v170 = vld [vmem:[%s161 + $0x40] sm:$0xff]
    %v171 = vld [vmem:[%s161 + $0x48] sm:$0xff]
    %v172 = vld [vmem:[%s161 + $0x50] sm:$0xff]
    %v173 = vld [vmem:[%s161 + $0x58] sm:$0xff]
    %v174 = vld [vmem:[%s161 + $0x60] sm:$0xff]
    %v175 = vld [vmem:[%s161 + $0x68] sm:$0xff]
    %v176 = vld [vmem:[%s161 + $0x70] sm:$0xff]
    %v177 = vld [vmem:[%s161 + $0x78] sm:$0xff]
    %s178 = scalar_lea.vmem %s2, 1
    %v179 = vld [vmem:[%s178] sm:$0x1]
    %v181 = vlaneseq
    %v182 = vshrl.u32 %v181, 7
    %v183 = vsub.s32 0, %v182
    %v184 = vrot.slane %v179, %v183
    %186 = vmatprep.subr.mxu0 0.0
    %187 = vmatpush1.msra.mxu0 %v162
    %188 = vmatprep.subr.mxu0 0.0
    %189 = vmatpush1.msra.mxu0 %v163
    %190 = vmatprep.subr.mxu0 0.0
    %191 = vmatpush1.msra.mxu0 %v164
    %192 = vmatprep.subr.mxu0 0.0
    %193 = vmatpush1.msra.mxu0 %v165
    %194 = vmatprep.subr.mxu0 0.0
    %195 = vmatpush1.msra.mxu0 %v166
    %196 = vmatprep.subr.mxu0 0.0
    %197 = vmatpush1.msra.mxu0 %v167
    %198 = vmatprep.subr.mxu0 0.0
    %199 = vmatpush1.msra.mxu0 %v168
    %200 = vmatprep.subr.mxu0 0.0
    %201 = vmatpush1.msra.mxu0 %v169
    %202 = vmatprep.subr.mxu0 0.0
    %203 = vmatpush1.msra.mxu0 %v170
    %204 = vmatprep.subr.mxu0 0.0
    %205 = vmatpush1.msra.mxu0 %v171
    %206 = vmatprep.subr.mxu0 0.0
    %207 = vmatpush1.msra.mxu0 %v172
    %208 = vmatprep.subr.mxu0 0.0
    %209 = vmatpush1.msra.mxu0 %v173
    %210 = vmatprep.subr.mxu0 0.0
    %211 = vmatpush1.msra.mxu0 %v174
    %212 = vmatprep.subr.mxu0 0.0
    %213 = vmatpush1.msra.mxu0 %v175
    %214 = vmatprep.subr.mxu0 0.0
    %215 = vmatpush1.msra.mxu0 %v176
    %216 = vmatprep.subr.mxu0 0.0
    %217 = vmatpush1.msra.mxu0 %v177
    %218 = vmatprep.subr.mxu0 0.0
    %219 = vmatpush1.msra.mxu0 0.0
    %220 = vmatprep.subr.mxu0 0.0
    %221 = vmatpush1.msra.mxu0 0.0
    %222 = vmatprep.subr.mxu0 0.0
    %223 = vmatpush1.msra.mxu0 0.0
    %224 = vmatprep.subr.mxu0 0.0
    %225 = vmatpush1.msra.mxu0 0.0
    %226 = vmatprep.subr.mxu0 0.0
    %227 = vmatpush1.msra.mxu0 0.0
    %228 = vmatprep.subr.mxu0 0.0
    %229 = vmatpush1.msra.mxu0 0.0
    %230 = vmatprep.subr.mxu0 0.0
    %231 = vmatpush1.msra.mxu0 0.0
    %232 = vmatprep.subr.mxu0 0.0
    %233 = vmatpush1.msra.mxu0 0.0
    %234 = vmatprep.subr.mxu0 0.0
    %235 = vmatpush1.msra.mxu0 0.0
    %236 = vmatprep.subr.mxu0 0.0
    %237 = vmatpush1.msra.mxu0 0.0
    %238 = vmatprep.subr.mxu0 0.0
    %239 = vmatpush1.msra.mxu0 0.0
    %240 = vmatprep.subr.mxu0 0.0
    %241 = vmatpush1.msra.mxu0 0.0
    %242 = vmatprep.subr.mxu0 0.0
    %243 = vmatpush1.msra.mxu0 0.0
    %244 = vmatprep.subr.mxu0 0.0
    %245 = vmatpush1.msra.mxu0 0.0
    %246 = vmatprep.subr.mxu0 0.0
    %247 = vmatpush1.msra.mxu0 0.0
    %248 = vmatprep.subr.mxu0 0.0
    %249 = vmatpush1.msra.mxu0 0.0
    %250 = vmatprep.mubr.f32.mxu0 0.0
    %251 = vmatmul.mubr.f32.gmra.mrb[0].mxu0 %v160
    %v252 = vpop.f32.mrb[0].mxu0
    %v253 = vadd.f32 %v184, %v252
    %v254 = vpop.f32.mrb[0].mxu0
    %255 = vdwg.mxu0
    %256 = vadd.xlane.f32.xlu0 %v253
    %v257 = vpop.xlane.xlu0 %256
    %v258 = vmul.f32 %v257, %v143
    %v259 = vmul.f32 %v253, %v253
    %260 = vadd.xlane.f32.xlu0 %v259
    %v261 = vpop.xlane.xlu0 %260
    %v262 = vmul.f32 %v261, %v143
    %v263 = vmul.f32 %v258, %v258
    %v264 = vsub.f32 %v262, %v263
    %v265 = vmax.f32 %v264, 0.0
    %v266 = vsub.f32 %v253, %v258
    %v267 = vadd.f32 %v265, 1e-05
    %v268 = vrsqrt.pop %v267
    %v269 = vmul.f32 %v266, %v268
    %v270 = vmul.f32 %v269, 0.5
    %v271 = vmul.f32 %v269, 0.70710677
    %v272 = verf.f32.pop %v271
    %v273 = vadd.f32 %v272, 1.0
    %v274 = vmul.f32 %v270, %v273
    %s275 = scalar_lea.vmem [#allocation5], 256
    %v276 = vld [vmem:[%s275] sm:$0xff]
    %v277 = vld [vmem:[%s275 + $0x8] sm:$0xff]
    %v278 = vld [vmem:[%s275 + $0x10] sm:$0xff]
    %v279 = vld [vmem:[%s275 + $0x18] sm:$0xff]
    %v280 = vld [vmem:[%s275 + $0x20] sm:$0xff]
    %v281 = vld [vmem:[%s275 + $0x28] sm:$0xff]
    %v282 = vld [vmem:[%s275 + $0x30] sm:$0xff]
    %v283 = vld [vmem:[%s275 + $0x38] sm:$0xff]
    %v284 = vld [vmem:[%s275 + $0x40] sm:$0xff]
    %v285 = vld [vmem:[%s275 + $0x48] sm:$0xff]
    %v286 = vld [vmem:[%s275 + $0x50] sm:$0xff]
    %v287 = vld [vmem:[%s275 + $0x58] sm:$0xff]
    %v288 = vld [vmem:[%s275 + $0x60] sm:$0xff]
    %v289 = vld [vmem:[%s275 + $0x68] sm:$0xff]
    %v290 = vld [vmem:[%s275 + $0x70] sm:$0xff]
    %v291 = vld [vmem:[%s275 + $0x78] sm:$0xff]
    %s292 = scalar_lea.vmem %s2, 2
    %v293 = vld [vmem:[%s292] sm:$0x1]
    %v295 = vlaneseq
    %v296 = vshrl.u32 %v295, 7
    %v297 = vsub.s32 0, %v296
    %v298 = vrot.slane %v293, %v297
    %300 = vmatprep.subr.mxu0 0.0
    %301 = vmatpush1.msra.mxu0 %v276
    %302 = vmatprep.subr.mxu0 0.0
    %303 = vmatpush1.msra.mxu0 %v277
    %304 = vmatprep.subr.mxu0 0.0
    %305 = vmatpush1.msra.mxu0 %v278
    %306 = vmatprep.subr.mxu0 0.0
    %307 = vmatpush1.msra.mxu0 %v279
    %308 = vmatprep.subr.mxu0 0.0
    %309 = vmatpush1.msra.mxu0 %v280
    %310 = vmatprep.subr.mxu0 0.0
    %311 = vmatpush1.msra.mxu0 %v281
    %312 = vmatprep.subr.mxu0 0.0
    %313 = vmatpush1.msra.mxu0 %v282
    %314 = vmatprep.subr.mxu0 0.0
    %315 = vmatpush1.msra.mxu0 %v283
    %316 = vmatprep.subr.mxu0 0.0
    %317 = vmatpush1.msra.mxu0 %v284
    %318 = vmatprep.subr.mxu0 0.0
    %319 = vmatpush1.msra.mxu0 %v285
    %320 = vmatprep.subr.mxu0 0.0
    %321 = vmatpush1.msra.mxu0 %v286
    %322 = vmatprep.subr.mxu0 0.0
    %323 = vmatpush1.msra.mxu0 %v287
    %324 = vmatprep.subr.mxu0 0.0
    %325 = vmatpush1.msra.mxu0 %v288
    %326 = vmatprep.subr.mxu0 0.0
    %327 = vmatpush1.msra.mxu0 %v289
    %328 = vmatprep.subr.mxu0 0.0
    %329 = vmatpush1.msra.mxu0 %v290
    %330 = vmatprep.subr.mxu0 0.0
    %331 = vmatpush1.msra.mxu0 %v291
    %332 = vmatprep.subr.mxu0 0.0
    %333 = vmatpush1.msra.mxu0 0.0
    %334 = vmatprep.subr.mxu0 0.0
    %335 = vmatpush1.msra.mxu0 0.0
    %336 = vmatprep.subr.mxu0 0.0
    %337 = vmatpush1.msra.mxu0 0.0
    %338 = vmatprep.subr.mxu0 0.0
    %339 = vmatpush1.msra.mxu0 0.0
    %340 = vmatprep.subr.mxu0 0.0
    %341 = vmatpush1.msra.mxu0 0.0
    %342 = vmatprep.subr.mxu0 0.0
    %343 = vmatpush1.msra.mxu0 0.0
    %344 = vmatprep.subr.mxu0 0.0
    %345 = vmatpush1.msra.mxu0 0.0
    %346 = vmatprep.subr.mxu0 0.0
    %347 = vmatpush1.msra.mxu0 0.0
    %348 = vmatprep.subr.mxu0 0.0
    %349 = vmatpush1.msra.mxu0 0.0
    %350 = vmatprep.subr.mxu0 0.0
    %351 = vmatpush1.msra.mxu0 0.0
    %352 = vmatprep.subr.mxu0 0.0
    %353 = vmatpush1.msra.mxu0 0.0
    %354 = vmatprep.subr.mxu0 0.0
    %355 = vmatpush1.msra.mxu0 0.0
    %356 = vmatprep.subr.mxu0 0.0
    %357 = vmatpush1.msra.mxu0 0.0
    %358 = vmatprep.subr.mxu0 0.0
    %359 = vmatpush1.msra.mxu0 0.0
    %360 = vmatprep.subr.mxu0 0.0
    %361 = vmatpush1.msra.mxu0 0.0
    %362 = vmatprep.subr.mxu0 0.0
    %363 = vmatpush1.msra.mxu0 0.0
    %364 = vmatprep.mubr.f32.mxu0 0.0
    %365 = vmatmul.mubr.f32.gmra.mrb[0].mxu0 %v274
    %v366 = vpop.f32.mrb[0].mxu0
    %v367 = vadd.f32 %v298, %v366
    %v368 = vpop.f32.mrb[0].mxu0
    %369 = vdwg.mxu0
    %370 = vadd.xlane.f32.xlu0 %v367
    %v371 = vpop.xlane.xlu0 %370
    %v372 = vmul.f32 %v371, %v143
    %v373 = vmul.f32 %v367, %v367
    %374 = vadd.xlane.f32.xlu0 %v373
    %v375 = vpop.xlane.xlu0 %374
    %v376 = vmul.f32 %v375, %v143
    %v377 = vmul.f32 %v372, %v372
    %v378 = vsub.f32 %v376, %v377
    %v379 = vmax.f32 %v378, 0.0
    %v380 = vsub.f32 %v367, %v372
    %v381 = vadd.f32 %v379, 1e-05
    %v382 = vrsqrt.pop %v381
    %v383 = vmul.f32 %v380, %v382
    %v384 = vmul.f32 %v383, 0.5
    %v385 = vmul.f32 %v383, 0.70710677
    %v386 = verf.f32.pop %v385
    %v387 = vadd.f32 %v386, 1.0
    %v388 = vmul.f32 %v384, %v387
    %s389 = scalar_lea.vmem [#allocation5], 384
    %v390 = vld [vmem:[%s389] sm:$0xff]
    %v391 = vld [vmem:[%s389 + $0x8] sm:$0xff]
    %v392 = vld [vmem:[%s389 + $0x10] sm:$0xff]
    %v393 = vld [vmem:[%s389 + $0x18] sm:$0xff]
    %v394 = vld [vmem:[%s389 + $0x20] sm:$0xff]
    %v395 = vld [vmem:[%s389 + $0x28] sm:$0xff]
    %v396 = vld [vmem:[%s389 + $0x30] sm:$0xff]
    %v397 = vld [vmem:[%s389 + $0x38] sm:$0xff]
    %v398 = vld [vmem:[%s389 + $0x40] sm:$0xff]
    %v399 = vld [vmem:[%s389 + $0x48] sm:$0xff]
    %v400 = vld [vmem:[%s389 + $0x50] sm:$0xff]
    %v401 = vld [vmem:[%s389 + $0x58] sm:$0xff]
    %v402 = vld [vmem:[%s389 + $0x60] sm:$0xff]
    %v403 = vld [vmem:[%s389 + $0x68] sm:$0xff]
    %v404 = vld [vmem:[%s389 + $0x70] sm:$0xff]
    %v405 = vld [vmem:[%s389 + $0x78] sm:$0xff]
    %s406 = scalar_lea.vmem %s2, 3
    %v407 = vld [vmem:[%s406] sm:$0x1]
    %v409 = vlaneseq
    %v410 = vshrl.u32 %v409, 7
    %v411 = vsub.s32 0, %v410
    %v412 = vrot.slane %v407, %v411
    %414 = vmatprep.subr.mxu0 0.0
    %415 = vmatpush1.msra.mxu0 %v390
    %416 = vmatprep.subr.mxu0 0.0
    %417 = vmatpush1.msra.mxu0 %v391
    %418 = vmatprep.subr.mxu0 0.0
    %419 = vmatpush1.msra.mxu0 %v392
    %420 = vmatprep.subr.mxu0 0.0
    %421 = vmatpush1.msra.mxu0 %v393
    %422 = vmatprep.subr.mxu0 0.0
    %423 = vmatpush1.msra.mxu0 %v394
    %424 = vmatprep.subr.mxu0 0.0
    %425 = vmatpush1.msra.mxu0 %v395
    %426 = vmatprep.subr.mxu0 0.0
    %427 = vmatpush1.msra.mxu0 %v396
    %428 = vmatprep.subr.mxu0 0.0
    %429 = vmatpush1.msra.mxu0 %v397
    %430 = vmatprep.subr.mxu0 0.0
    %431 = vmatpush1.msra.mxu0 %v398
    %432 = vmatprep.subr.mxu0 0.0
    %433 = vmatpush1.msra.mxu0 %v399
    %434 = vmatprep.subr.mxu0 0.0
    %435 = vmatpush1.msra.mxu0 %v400
    %436 = vmatprep.subr.mxu0 0.0
    %437 = vmatpush1.msra.mxu0 %v401
    %438 = vmatprep.subr.mxu0 0.0
    %439 = vmatpush1.msra.mxu0 %v402
    %440 = vmatprep.subr.mxu0 0.0
    %441 = vmatpush1.msra.mxu0 %v403
    %442 = vmatprep.subr.mxu0 0.0
    %443 = vmatpush1.msra.mxu0 %v404
    %444 = vmatprep.subr.mxu0 0.0
    %445 = vmatpush1.msra.mxu0 %v405
    %446 = vmatprep.subr.mxu0 0.0
    %447 = vmatpush1.msra.mxu0 0.0
    %448 = vmatprep.subr.mxu0 0.0
    %449 = vmatpush1.msra.mxu0 0.0
    %450 = vmatprep.subr.mxu0 0.0
    %451 = vmatpush1.msra.mxu0 0.0
    %452 = vmatprep.subr.mxu0 0.0
    %453 = vmatpush1.msra.mxu0 0.0
    %454 = vmatprep.subr.mxu0 0.0
    %455 = vmatpush1.msra.mxu0 0.0
    %456 = vmatprep.subr.mxu0 0.0
    %457 = vmatpush1.msra.mxu0 0.0
    %458 = vmatprep.subr.mxu0 0.0
    %459 = vmatpush1.msra.mxu0 0.0
    %460 = vmatprep.subr.mxu0 0.0
    %461 = vmatpush1.msra.mxu0 0.0
    %462 = vmatprep.subr.mxu0 0.0
    %463 = vmatpush1.msra.mxu0 0.0
    %464 = vmatprep.subr.mxu0 0.0
    %465 = vmatpush1.msra.mxu0 0.0
    %466 = vmatprep.subr.mxu0 0.0
    %467 = vmatpush1.msra.mxu0 0.0
    %468 = vmatprep.subr.mxu0 0.0
    %469 = vmatpush1.msra.mxu0 0.0
    %470 = vmatprep.subr.mxu0 0.0
    %471 = vmatpush1.msra.mxu0 0.0
    %472 = vmatprep.subr.mxu0 0.0
    %473 = vmatpush1.msra.mxu0 0.0
    %474 = vmatprep.subr.mxu0 0.0
    %475 = vmatpush1.msra.mxu0 0.0
    %476 = vmatprep.subr.mxu0 0.0
    %477 = vmatpush1.msra.mxu0 0.0
    %478 = vmatprep.mubr.f32.mxu0 0.0
    %479 = vmatmul.mubr.f32.gmra.mrb[0].mxu0 %v388
    %v480 = vpop.f32.mrb[0].mxu0
    %v481 = vadd.f32 %v412, %v480
    %v482 = vpop.f32.mrb[0].mxu0
    %483 = vdwg.mxu0
    %484 = vadd.xlane.f32.xlu0 %v481
    %v485 = vpop.xlane.xlu0 %484
    %v486 = vmul.f32 %v485, %v143
    %v487 = vmul.f32 %v481, %v481
    %488 = vadd.xlane.f32.xlu0 %v487
    %v489 = vpop.xlane.xlu0 %488
    %v490 = vmul.f32 %v489, %v143
    %v491 = vmul.f32 %v486, %v486
    %v492 = vsub.f32 %v490, %v491
    %v493 = vmax.f32 %v492, 0.0
    %v494 = vsub.f32 %v481, %v486
    %v495 = vadd.f32 %v493, 1e-05
    %v496 = vrsqrt.pop %v495
    %v497 = vmul.f32 %v494, %v496
    %v498 = vmul.f32 %v497, 0.5
    %v499 = vmul.f32 %v497, 0.70710677
    %v500 = verf.f32.pop %v499
    %v501 = vadd.f32 %v500, 1.0
    %v502 = vmul.f32 %v498, %v501
    %503 = vst [vmem:[#allocation7] sm:$0xff] %v502
    // Predicated region
    $region26: #{tpu_custom_call.1} parent=1 // pred_check
      _
    $region27: #{tpu_custom_call.1} parent=1 // pred_check_branch
      %505 = sbr.rel (0) target = $region29
    $region28: #{tpu_custom_call.1} parent=1 // pred_region
      %s507 = ssub.s32 128, 128
      %508 = vsyncadd [#allocation4], %s507
      %s510 = sshll.u32 [#allocation7], 4
      %s511 = int_to_ptr.vmem [resolvable:$true] %s510
      %513 = dma.vmem_to_hbm [thread:$0]  %s511, 128, %s3, [#allocation4]
    $region29: #{tpu_custom_call.1} parent=1 // pred_fallthru
      _
    // Predicated region
    $region30: #{tpu_custom_call.1} parent=1 // pred_check
      _
    $region31: #{tpu_custom_call.1} parent=1 // pred_check_branch
      %515 = sbr.rel (0) target = $region33
    $region32: #{tpu_custom_call.1} parent=1 // pred_region
      %516 = dma.done [#allocation4], 128
    $region33: #{tpu_custom_call.1} parent=1 // pred_fallthru
      _
    %517 = vsyncpa [#allocation3], 1
    %518 = vsyncpa [#allocation6], 1
    %519 = vsyncpa [#allocation4], 1

</llo_original>
